<compile_context>
chip_gen: v7x
topology: tpu7x:2x2x1
jax: 0.10.0
libtpu: 0.0.40
codegen_flags: <defaults>
</compile_context>

<pallas_src>
import functools
import math

import jax
import jax.numpy as jnp
from jax.experimental import pallas as pl
from jax.experimental.pallas import tpu as pltpu

_LANE = 128     # TPU lane width: last dims are zero-padded to a multiple of this
_SUBLANE = 8    # f32 sublane tiling


def _round_up(n, m):
    return ((n + m - 1) // m) * m


def _pad_to(a, shape):
    pads = [(0, t - s) for s, t in zip(a.shape, shape)]
    if any(p for _, p in pads):
        a = jnp.pad(a, pads)
    return a


def _activation(x, kind):
    if kind == "gelu":
        # exact (erf-based) GELU, matching torch.nn.GELU() default
        return 0.5 * x * (1.0 + jax.lax.erf(x * 0.7071067811865476))
    return jnp.maximum(x, 0.0)  # ReLU


def _mlp_kernel(x_ref, w1_ref, b1_ref, w2_ref, b2_ref, w3_ref, b3_ref, o_ref,
                *, activation):
    # fc1: MXU matmul (bf16 or f32 operands, f32 accumulation) + activation.
    h = jnp.dot(x_ref[...], w1_ref[...], preferred_element_type=jnp.float32)
    h = _activation(h + b1_ref[...], activation)
    # dropout: inference mode -> identity.
    # TODO(synk): training-mode dropout (pltpu.prng_*) not implemented.

    # fc2: MXU matmul + activation. Cast back to the operand dtype so bf16
    # params keep the fast MXU path; accumulation stays f32.
    h = jnp.dot(h.astype(w2_ref.dtype), w2_ref[...],
                preferred_element_type=jnp.float32)
    h = _activation(h + b2_ref[...], activation)

    # fc3 (out_features == 1): keep it OFF the MXU. An N=1 matmul uses 1/128
    # (1/256 on v6e/v7x) of the MXU output width; a VPU multiply + XLU lane
    # reduction runs on otherwise-idle VLIW slots. W3 is passed as a (1, H)
    # f32 row; b3 is a scalar in SMEM.
    y = jnp.sum(h * w3_ref[...], axis=-1, keepdims=True) + b3_ref[0]
    o_ref[...] = jax.nn.sigmoid(y).astype(o_ref.dtype)


def mlp_forward(x, params, *, activation="relu", block_m=512):
    """x: (B, 4*embedding_size) -> (B, 1) float32 sigmoid outputs.

    x.dtype (float32 or bfloat16) selects the matmul operand dtype; weights are
    cast to match.  Accumulation is always float32.
    """
    w1, b1, w2, b2, w3, b3 = params
    B, d_in = x.shape
    H = w1.shape[1]
    assert w1.shape == (d_in, H) and w2.shape == (H, H) and w3.shape == (H, 1)
    assert b1.shape == (1, H) and b2.shape == (1, H) and b3.shape == (1, 1)

    compute_dtype = x.dtype

    # ---- feature-dim padding: make every operand's last dim lane-dense.
    # (activation(0)==0 for both ReLU and GELU, so zero-padding is exact.)
    # Ideally done once at parameter-load time; these are cheap XLA pads here.
    d_in_p = _round_up(d_in, _LANE)
    h_p = _round_up(H, _LANE)
    x_p = _pad_to(x, (B, d_in_p)).astype(compute_dtype)
    w1_p = _pad_to(w1, (d_in_p, h_p)).astype(compute_dtype)
    w2_p = _pad_to(w2, (h_p, h_p)).astype(compute_dtype)
    b1_p = _pad_to(b1, (1, h_p)).astype(jnp.float32)
    b2_p = _pad_to(b2, (1, h_p)).astype(jnp.float32)
    w3_row = _pad_to(w3.T, (1, h_p)).astype(jnp.float32)   # fc3 stays f32 on the VPU
    b3_s = b3.reshape((1,)).astype(jnp.float32)            # scalar -> SMEM

    # ---- batch tile: large & MXU-aligned (block_m default 512, a multiple of
    # 128 and 256); when B allows, keep >=2 grid steps so a v7x megacore can
    # shard the ("parallel",) batch axis across both TensorCores.
    block_m = max(_SUBLANE, (block_m // _SUBLANE) * _SUBLANE)
    if B <= block_m:
        bm = B                                     # single full-batch tile
    elif B <= 2 * block_m:
        bm = _round_up(pl.cdiv(B, 2), _SUBLANE)    # two balanced tiles
    else:
        bm = block_m
    grid = (pl.cdiv(B, bm),)

    # ---- VMEM budget: x/out tiles + resident weights, x2 for double-buffered
    # pipelining; raise the scoped VMEM limit accordingly (defaults are only
    # 16/32 MiB on v5e / v6e+v7x).
    # TODO(synk): for very large H, tile W2 over K with an "arbitrary"
    # reduction grid axis + f32 accumulator (v7x has only 64 MiB physical VMEM).
    itemsize = jnp.dtype(compute_dtype).itemsize
    vmem_bytes = 2 * (bm * d_in_p * itemsize + bm * 4
                      + (d_in_p + h_p) * h_p * itemsize
                      + 3 * _SUBLANE * h_p * 4)
    vmem_limit = int(min(max(2 * vmem_bytes, 32 * 1024 * 1024),
                         100 * 1024 * 1024))

    # ---- advisory cost estimate so XLA schedules neighbours around the call.
    flops = 2 * B * (d_in * H + H * H + H)
    transcendentals = B * (2 * H + 1) if activation == "gelu" else B
    bytes_accessed = ((x.size + w1.size + w2.size) * itemsize
                      + (b1.size + b2.size + w3.size + 1 + B) * 4)
    cost = pl.CostEstimate(flops=int(flops),
                           transcendentals=int(transcendentals),
                           bytes_accessed=int(bytes_accessed))

    kernel = functools.partial(_mlp_kernel, activation=activation)

    # NOTE(perf): the output block stays (bm, 1).  Output HBM traffic is only
    # B*4 bytes (<= 1/d_in of the activation traffic and far below the weight
    # traffic), so the masked-lane store is not on the critical path here; a
    # lane-dense (num_tiles, bm) output layout would require an in-kernel
    # sublane->lane relayout of the per-row scalars.
    return pl.pallas_call(
        kernel,
        out_shape=jax.ShapeDtypeStruct((B, 1), jnp.float32),
        grid_spec=pltpu.PrefetchScalarGridSpec(
            num_scalar_prefetch=0,
            grid=grid,
            in_specs=[
                pl.BlockSpec((bm, d_in_p), lambda i: (i, 0)),     # x tile
                pl.BlockSpec((d_in_p, h_p), lambda i: (0, 0)),    # W1 (resident)
                pl.BlockSpec((1, h_p), lambda i: (0, 0)),         # b1
                pl.BlockSpec((h_p, h_p), lambda i: (0, 0)),       # W2 (resident)
                pl.BlockSpec((1, h_p), lambda i: (0, 0)),         # b2
                pl.BlockSpec((1, h_p), lambda i: (0, 0)),         # W3 as (1,H) row
                pl.BlockSpec(memory_space=pltpu.MemorySpace.SMEM),  # b3 scalar
            ],
            out_specs=pl.BlockSpec((bm, 1), lambda i: (i, 0)),
        ),
        compiler_params=pltpu.CompilerParams(
            dimension_semantics=("parallel",),
            vmem_limit_bytes=vmem_limit),
        cost_estimate=cost,
    )(x_p, w1_p, b1_p, w2_p, b2_p, w3_row, b3_s)


def init_params(key, embedding_size, hidden_size):
    """Deterministic init matching nn.Linear shapes (uniform +-1/sqrt(fan_in))."""
    d_in = 4 * embedding_size
    keys = jax.random.split(key, 6)

    def lin(kw, kb, fan_in, fan_out):
        bound = 1.0 / math.sqrt(fan_in)
        w = jax.random.uniform(kw, (fan_in, fan_out), jnp.float32, -bound, bound)
        b = jax.random.uniform(kb, (1, fan_out), jnp.float32, -bound, bound)
        return w, b

    w1, b1 = lin(keys[0], keys[1], d_in, hidden_size)
    w2, b2 = lin(keys[2], keys[3], hidden_size, hidden_size)
    w3, b3 = lin(keys[4], keys[5], hidden_size, 1)
    return (w1, b1, w2, b2, w3, b3)


def _reference(x, params, activation, compute_dtype):
    """Pure-JAX reference mimicking the kernel's dtype handling."""
    w1, b1, w2, b2, w3, b3 = params
    cd, f32 = compute_dtype, jnp.float32
    h = _activation(x.astype(cd).astype(f32) @ w1.astype(cd).astype(f32) + b1,
                    activation)
    h = _activation(h.astype(cd).astype(f32) @ w2.astype(cd).astype(f32) + b2,
                    activation)
    y = h @ w3 + b3
    return jax.nn.sigmoid(y)


if __name__ == "__main__":
    embedding_size = 8
    hidden_size = 32
    activation = "relu"  # MLP(..., forward_activation='relu'); 'gelu' also supported

    key = jax.random.PRNGKey(0)
    k_x, k_p = jax.random.split(key)
    params = init_params(k_p, embedding_size, hidden_size)

    # --- f32 path, single tile --------------------------------------------
    batch = 8
    x = jax.random.normal(k_x, (batch, 4 * embedding_size), jnp.float32)
    out = jax.block_until_ready(mlp_forward(x, params, activation=activation))
    ref = _reference(x, params, activation, jnp.float32)
    assert out.shape == (batch, 1)
    assert jnp.max(jnp.abs(out - ref)) < 1e-4

    # --- f32 path, multi-tile grid with a partial last tile ----------------
    batch2 = 20
    x2 = jax.random.normal(jax.random.PRNGKey(1), (batch2, 4 * embedding_size),
                           jnp.float32)
    out2 = jax.block_until_ready(
        mlp_forward(x2, params, activation=activation, block_m=8))
    ref2 = _reference(x2, params, activation, jnp.float32)
    assert out2.shape == (batch2, 1)
    assert jnp.max(jnp.abs(out2 - ref2)) < 1e-4

    # --- bf16 operand path (bf16 MXU throughput, half the HBM traffic) -----
    out3 = jax.block_until_ready(
        mlp_forward(x.astype(jnp.bfloat16), params, activation=activation))
    ref3 = _reference(x, params, activation, jnp.bfloat16)
    assert out3.shape == (batch, 1)
    assert jnp.max(jnp.abs(out3 - ref3)) < 1e-2

    print("KERNEL_OK")
</pallas_src>

<mosaic_0001>
module attributes {stable_mosaic.version = 11 : i64} {
  func.func @_mlp_kernel(%arg0: i32, %arg1: memref<8x128xf32, #tpu.memory_space<vmem>>, %arg2: memref<128x128xf32, #tpu.memory_space<vmem>>, %arg3: memref<1x128xf32, #tpu.memory_space<vmem>>, %arg4: memref<128x128xf32, #tpu.memory_space<vmem>>, %arg5: memref<1x128xf32, #tpu.memory_space<vmem>>, %arg6: memref<1x128xf32, #tpu.memory_space<vmem>>, %arg7: memref<1xf32, #tpu.memory_space<smem>>, %arg8: memref<8x1xf32, #tpu.memory_space<vmem>>) attributes {dimension_semantics = [#tpu.dimension_semantics<parallel>], iteration_bounds = array<i64: 1>, scalar_prefetch = 0 : i64, scratch_operands = 0 : i64, tpu.core_type = #tpu.core_type<tc>, window_params = [{transform_indices = @transform_0, window_bounds = array<i64: 8, 128>}, {pipeline_mode = #tpu.pipeline_mode<synchronous>, transform_indices = @transform_1, window_bounds = array<i64: 128, 128>}, {pipeline_mode = #tpu.pipeline_mode<synchronous>, transform_indices = @transform_2, window_bounds = array<i64: 1, 128>}, {pipeline_mode = #tpu.pipeline_mode<synchronous>, transform_indices = @transform_3, window_bounds = array<i64: 128, 128>}, {pipeline_mode = #tpu.pipeline_mode<synchronous>, transform_indices = @transform_4, window_bounds = array<i64: 1, 128>}, {pipeline_mode = #tpu.pipeline_mode<synchronous>, transform_indices = @transform_5, window_bounds = array<i64: 1, 128>}, {transform_indices = @transform_6, window_bounds = array<i64: 1>}, {transform_indices = @transform_7, window_bounds = array<i64: 8, 1>}]} {
    %c0 = arith.constant 0 : index
    %c0_0 = arith.constant 0 : index
    %0 = vector.load %arg1[%c0, %c0_0] : memref<8x128xf32, #tpu.memory_space<vmem>>, vector<8x128xf32>
    %c0_1 = arith.constant 0 : index
    %c0_2 = arith.constant 0 : index
    %1 = vector.load %arg2[%c0_1, %c0_2] : memref<128x128xf32, #tpu.memory_space<vmem>>, vector<128x128xf32>
    %cst = arith.constant dense<0.000000e+00> : vector<8x128xf32>
    %2 = tpu.matmul %0, %1, %cst {dimension_numbers = #tpu.dot_dimension_numbers<[1], [0], [0], [1], [0, 0, 1, 1], [], []>} : vector<8x128xf32>, vector<128x128xf32>, vector<8x128xf32> -> vector<8x128xf32>
    %c0_3 = arith.constant 0 : index
    %c0_4 = arith.constant 0 : index
    %3 = vector.load %arg3[%c0_3, %c0_4] : memref<1x128xf32, #tpu.memory_space<vmem>>, vector<1x128xf32>
    %4 = vector.broadcast %3 : vector<1x128xf32> to vector<8x128xf32>
    %5 = arith.addf %2, %4 : vector<8x128xf32>
    %cst_5 = arith.constant 0.000000e+00 : f32
    %6 = vector.broadcast %cst_5 : f32 to vector<8x128xf32>
    %7 = arith.maximumf %5, %6 : vector<8x128xf32>
    %c0_6 = arith.constant 0 : index
    %c0_7 = arith.constant 0 : index
    %8 = vector.load %arg4[%c0_6, %c0_7] : memref<128x128xf32, #tpu.memory_space<vmem>>, vector<128x128xf32>
    %cst_8 = arith.constant dense<0.000000e+00> : vector<8x128xf32>
    %9 = tpu.matmul %7, %8, %cst_8 {dimension_numbers = #tpu.dot_dimension_numbers<[1], [0], [0], [1], [0, 0, 1, 1], [], []>} : vector<8x128xf32>, vector<128x128xf32>, vector<8x128xf32> -> vector<8x128xf32>
    %c0_9 = arith.constant 0 : index
    %c0_10 = arith.constant 0 : index
    %10 = vector.load %arg5[%c0_9, %c0_10] : memref<1x128xf32, #tpu.memory_space<vmem>>, vector<1x128xf32>
    %11 = vector.broadcast %10 : vector<1x128xf32> to vector<8x128xf32>
    %12 = arith.addf %9, %11 : vector<8x128xf32>
    %cst_11 = arith.constant 0.000000e+00 : f32
    %13 = vector.broadcast %cst_11 : f32 to vector<8x128xf32>
    %14 = arith.maximumf %12, %13 : vector<8x128xf32>
    %c0_12 = arith.constant 0 : index
    %c0_13 = arith.constant 0 : index
    %15 = vector.load %arg6[%c0_12, %c0_13] : memref<1x128xf32, #tpu.memory_space<vmem>>, vector<1x128xf32>
    %16 = vector.broadcast %15 : vector<1x128xf32> to vector<8x128xf32>
    %17 = arith.mulf %14, %16 : vector<8x128xf32>
    %cst_14 = arith.constant dense<0.000000e+00> : vector<8xf32>
    %18 = vector.multi_reduction <add>, %17, %cst_14 [1] : vector<8x128xf32> to vector<8xf32>
    %19 = vector.shape_cast %18 : vector<8xf32> to vector<8x1xf32>
    %c0_15 = arith.constant 0 : index
    %20 = memref.load %arg7[%c0_15] : memref<1xf32, #tpu.memory_space<smem>>
    %21 = vector.broadcast %20 : f32 to vector<8x1xf32>
    %22 = arith.addf %19, %21 : vector<8x1xf32>
    %23 = arith.negf %22 : vector<8x1xf32>
    %24 = math.exp %23 : vector<8x1xf32>
    %cst_16 = arith.constant 1.000000e+00 : f32
    %25 = vector.broadcast %cst_16 : f32 to vector<8x1xf32>
    %26 = arith.addf %25, %24 : vector<8x1xf32>
    %27 = arith.divf %25, %26 : vector<8x1xf32>
    %c0_17 = arith.constant 0 : index
    %c0_18 = arith.constant 0 : index
    %28 = vector.load %arg8[%c0_17, %c0_18] : memref<8x1xf32, #tpu.memory_space<vmem>>, vector<8x1xf32>
    tpu.vector_store %arg8[%c0_17, %c0_18], %27 {strides = array<i32>} : memref<8x1xf32, #tpu.memory_space<vmem>>, vector<8x1xf32>,
    return
  }
  func.func @transform_0(%arg0: i32) -> (i32, i32) {
    %c0_i32 = arith.constant 0 : i32
    %c0_i32_0 = arith.constant 0 : i32
    return %arg0, %c0_i32 : i32, i32
  }
  func.func @transform_1(%arg0: i32) -> (i32, i32) {
    %c0_i32 = arith.constant 0 : i32
    %c0_i32_0 = arith.constant 0 : i32
    %c0_i32_1 = arith.constant 0 : i32
    return %c0_i32, %c0_i32_0 : i32, i32
  }
  func.func @transform_2(%arg0: i32) -> (i32, i32) {
    %c0_i32 = arith.constant 0 : i32
    %c0_i32_0 = arith.constant 0 : i32
    %c0_i32_1 = arith.constant 0 : i32
    return %c0_i32, %c0_i32_0 : i32, i32
  }
  func.func @transform_3(%arg0: i32) -> (i32, i32) {
    %c0_i32 = arith.constant 0 : i32
    %c0_i32_0 = arith.constant 0 : i32
    %c0_i32_1 = arith.constant 0 : i32
    return %c0_i32, %c0_i32_0 : i32, i32
  }
  func.func @transform_4(%arg0: i32) -> (i32, i32) {
    %c0_i32 = arith.constant 0 : i32
    %c0_i32_0 = arith.constant 0 : i32
    %c0_i32_1 = arith.constant 0 : i32
    return %c0_i32, %c0_i32_0 : i32, i32
  }
  func.func @transform_5(%arg0: i32) -> (i32, i32) {
    %c0_i32 = arith.constant 0 : i32
    %c0_i32_0 = arith.constant 0 : i32
    %c0_i32_1 = arith.constant 0 : i32
    return %c0_i32, %c0_i32_0 : i32, i32
  }
  func.func @transform_6(%arg0: i32) -> i32 {
    %c0_i32 = arith.constant 0 : i32
    %c0_i32_0 = arith.constant 0 : i32
    return %c0_i32 : i32
  }
  func.func @transform_7(%arg0: i32) -> (i32, i32) {
    %c0_i32 = arith.constant 0 : i32
    %c0_i32_0 = arith.constant 0 : i32
    return %arg0, %c0_i32 : i32, i32
  }
}

</mosaic_0001>

<llo_original>
// kernel: tpu_custom_call.1
$region0: #{tpu_custom_call.1}
  #allocation0 [shape = 'u32[]', space=smem, size = 0x4, offset = 0x4, fixed_abs, tag = 'smem constant byte address 0x4 - core index']
  #allocation1 [shape = 'u32[144,128]{1,0:T(1,128)}', space=vmem, size = 0x12000, scoped, tag = 'internal scratch']
  #allocation2 [shape = 'f32[1]{0:T(128)S(6)}', space=smem, size = 0x200, scoped, tag = 'scoped memory for tpu_custom_call.1']
  %s0 = inlined_call_operand.hbm [shape: f32[8,128], index: 0, kind: input, shape index: {}]
  %s1 = inlined_call_operand.hbm [shape: f32[128,128], index: 1, kind: input, shape index: {}]
  %s2 = inlined_call_operand.vmem [shape: f32[1,128], index: 2, kind: input, shape index: {}]
  %s3 = inlined_call_operand.hbm [shape: f32[128,128], index: 3, kind: input, shape index: {}]
  %s4 = inlined_call_operand.vmem [shape: f32[1,128], index: 4, kind: input, shape index: {}]
  %s5 = inlined_call_operand.vmem [shape: f32[1,128], index: 5, kind: input, shape index: {}]
  %s6 = inlined_call_operand.<no memory space> [shape: f32[1], index: 6, kind: input, shape index: {}]
  %s7 = inlined_call_operand.vmem [shape: f32[8,1], index: 7, kind: output, shape index: {}]
  %s8 = sld [smem:[#allocation0]]
  $region50: #{tpu_custom_call.1} parent=0
    _
  %s10 = ssub.s32 1, %s8
  %s11 = scalar_select 0, %s10, %s8
  %12 = sst [smem:[#allocation2]] %s6
  $region1: #{tpu_custom_call.1} parent=0
    #allocation3 [shape = 'u8[4096]{0}', space=vmem, size = 0x1000, scoped, tag = 'input window, operand 0, single buffered']
    #allocation4 [shape = 's32[1]{0}', space=sflag, size = 0x4, scoped, tag = 'scoped memory for tpu_custom_call.1']
    #allocation5 [shape = 'u8[65536]{0}', space=vmem, size = 0x10000, scoped, tag = 'input window, operand 1, single buffered']
    #allocation6 [shape = 's32[1]{0}', space=sflag, size = 0x4, scoped, tag = 'scoped memory for tpu_custom_call.1']
    #allocation7 [shape = 'u8[65536]{0}', space=vmem, size = 0x10000, scoped, tag = 'input window, operand 3, single buffered']
    %13 = vsyncpa [#allocation4], 0
    %14 = vsyncpa [#allocation6], 0
    // Predicated region
    $region2: #{tpu_custom_call.1} parent=1 // pred_check
      _
    $region3: #{tpu_custom_call.1} parent=1 // pred_check_branch
      %16 = sbr.rel (0) target = $region5
    $region4: #{tpu_custom_call.1} parent=1 // pred_region
      %s18 = ssub.s32 128, 128
      %19 = vsyncadd [#allocation4], %s18
      %s21 = sshll.u32 [#allocation3], 4
      %s22 = int_to_ptr.vmem [resolvable:$true] %s21
      %24 = dma.hbm_to_vmem [thread:$0]  %s0, 128, %s22, [#allocation4]
    $region5: #{tpu_custom_call.1} parent=1 // pred_fallthru
      _
    // Predicated region
    $region6: #{tpu_custom_call.1} parent=1 // pred_check
      _
    $region7: #{tpu_custom_call.1} parent=1 // pred_check_branch
      %26 = sbr.rel (0) target = $region9
    $region8: #{tpu_custom_call.1} parent=1 // pred_region
      %s28 = ssub.s32 2048, 2048
      %29 = vsyncadd [#allocation6], %s28
      %s30 = sshll.u32 [#allocation5], 4
      %s31 = int_to_ptr.vmem [resolvable:$true] %s30
      %36 = dma.hbm_to_vmem [thread:$0]  %s1, 2048, %s31, [#allocation6], 128, 128, 8
    $region9: #{tpu_custom_call.1} parent=1 // pred_fallthru
      _
    // Predicated region
    $region10: #{tpu_custom_call.1} parent=1 // pred_check
      _
    $region11: #{tpu_custom_call.1} parent=1 // pred_check_branch
      %38 = sbr.rel (0) target = $region13
    $region12: #{tpu_custom_call.1} parent=1 // pred_region
      _
    $region13: #{tpu_custom_call.1} parent=1 // pred_fallthru
      _
    // Predicated region
    $region14: #{tpu_custom_call.1} parent=1 // pred_check
      _
    $region15: #{tpu_custom_call.1} parent=1 // pred_check_branch
      %40 = sbr.rel (0) target = $region17
    $region16: #{tpu_custom_call.1} parent=1 // pred_region
      %s42 = ssub.s32 2048, 2048
      %43 = vsyncadd [#allocation6], %s42
      %s44 = sshll.u32 [#allocation7], 4
      %s45 = int_to_ptr.vmem [resolvable:$true] %s44
      %50 = dma.hbm_to_vmem [thread:$0]  %s3, 2048, %s45, [#allocation6], 128, 128, 8
    $region17: #{tpu_custom_call.1} parent=1 // pred_fallthru
      _
    // Predicated region
    $region18: #{tpu_custom_call.1} parent=1 // pred_check
      _
    $region19: #{tpu_custom_call.1} parent=1 // pred_check_branch
      %52 = sbr.rel (0) target = $region21
    $region20: #{tpu_custom_call.1} parent=1 // pred_region
      _
    $region21: #{tpu_custom_call.1} parent=1 // pred_fallthru
      _
    // Predicated region
    $region22: #{tpu_custom_call.1} parent=1 // pred_check
      _
    $region23: #{tpu_custom_call.1} parent=1 // pred_check_branch
      %54 = sbr.rel (0) target = $region25
    $region24: #{tpu_custom_call.1} parent=1 // pred_region
      _
    $region25: #{tpu_custom_call.1} parent=1 // pred_fallthru
      _
    // Predicated region
    $region26: #{tpu_custom_call.1} parent=1 // pred_check
      _
    $region27: #{tpu_custom_call.1} parent=1 // pred_check_branch
      %56 = sbr.rel (0) target = $region29
    $region28: #{tpu_custom_call.1} parent=1 // pred_region
      _
    $region29: #{tpu_custom_call.1} parent=1 // pred_fallthru
      _
    // Predicated region
    $region30: #{tpu_custom_call.1} parent=1 // pred_check
      _
    $region31: #{tpu_custom_call.1} parent=1 // pred_check_branch
      %58 = sbr.rel (0) target = $region33
    $region32: #{tpu_custom_call.1} parent=1 // pred_region
      %59 = dma.done [#allocation4], 128
    $region33: #{tpu_custom_call.1} parent=1 // pred_fallthru
      _
    // Predicated region
    $region34: #{tpu_custom_call.1} parent=1 // pred_check
      _
    $region35: #{tpu_custom_call.1} parent=1 // pred_check_branch
      %61 = sbr.rel (0) target = $region37
    $region36: #{tpu_custom_call.1} parent=1 // pred_region
      %62 = dma.done [#allocation6], 2048
    $region37: #{tpu_custom_call.1} parent=1 // pred_fallthru
      _
    // Predicated region
    $region38: #{tpu_custom_call.1} parent=1 // pred_check
      _
    $region39: #{tpu_custom_call.1} parent=1 // pred_check_branch
      %64 = sbr.rel (0) target = $region41
    $region40: #{tpu_custom_call.1} parent=1 // pred_region
      %65 = dma.done [#allocation6], 2048
    $region41: #{tpu_custom_call.1} parent=1 // pred_fallthru
      _
    %v66 = vld [vmem:[#allocation3] sm:$0xff]
    %v67 = vld [vmem:[#allocation5] sm:$0xff]
    %v68 = vld [vmem:[#allocation5 + $0x8] sm:$0xff]
    %v69 = vld [vmem:[#allocation5 + $0x10] sm:$0xff]
    %v70 = vld [vmem:[#allocation5 + $0x18] sm:$0xff]
    %v71 = vld [vmem:[#allocation5 + $0x20] sm:$0xff]
    %v72 = vld [vmem:[#allocation5 + $0x28] sm:$0xff]
    %v73 = vld [vmem:[#allocation5 + $0x30] sm:$0xff]
    %v74 = vld [vmem:[#allocation5 + $0x38] sm:$0xff]
    %v75 = vld [vmem:[#allocation5 + $0x40] sm:$0xff]
    %v76 = vld [vmem:[#allocation5 + $0x48] sm:$0xff]
    %v77 = vld [vmem:[#allocation5 + $0x50] sm:$0xff]
    %v78 = vld [vmem:[#allocation5 + $0x58] sm:$0xff]
    %v79 = vld [vmem:[#allocation5 + $0x60] sm:$0xff]
    %v80 = vld [vmem:[#allocation5 + $0x68] sm:$0xff]
    %v81 = vld [vmem:[#allocation5 + $0x70] sm:$0xff]
    %v82 = vld [vmem:[#allocation5 + $0x78] sm:$0xff]
    %v83 = vld [vmem:[%s2] sm:$0x1]
    %v85 = vlaneseq
    %v86 = vshrl.u32 %v85, 7
    %v87 = vsub.s32 0, %v86
    %v88 = vrot.slane %v83, %v87
    %90 = vmatprep.subr.mxu0 0.0
    %91 = vmatpush1.msra.mxu0 %v67
    %92 = vmatprep.subr.mxu0 0.0
    %93 = vmatpush1.msra.mxu0 %v68
    %94 = vmatprep.subr.mxu0 0.0
    %95 = vmatpush1.msra.mxu0 %v69
    %96 = vmatprep.subr.mxu0 0.0
    %97 = vmatpush1.msra.mxu0 %v70
    %98 = vmatprep.subr.mxu0 0.0
    %99 = vmatpush1.msra.mxu0 %v71
    %100 = vmatprep.subr.mxu0 0.0
    %101 = vmatpush1.msra.mxu0 %v72
    %102 = vmatprep.subr.mxu0 0.0
    %103 = vmatpush1.msra.mxu0 %v73
    %104 = vmatprep.subr.mxu0 0.0
    %105 = vmatpush1.msra.mxu0 %v74
    %106 = vmatprep.subr.mxu0 0.0
    %107 = vmatpush1.msra.mxu0 %v75
    %108 = vmatprep.subr.mxu0 0.0
    %109 = vmatpush1.msra.mxu0 %v76
    %110 = vmatprep.subr.mxu0 0.0
    %111 = vmatpush1.msra.mxu0 %v77
    %112 = vmatprep.subr.mxu0 0.0
    %113 = vmatpush1.msra.mxu0 %v78
    %114 = vmatprep.subr.mxu0 0.0
    %115 = vmatpush1.msra.mxu0 %v79
    %116 = vmatprep.subr.mxu0 0.0
    %117 = vmatpush1.msra.mxu0 %v80
    %118 = vmatprep.subr.mxu0 0.0
    %119 = vmatpush1.msra.mxu0 %v81
    %120 = vmatprep.subr.mxu0 0.0
    %121 = vmatpush1.msra.mxu0 %v82
    %122 = vmatprep.subr.mxu0 0.0
    %123 = vmatpush1.msra.mxu0 0.0
    %124 = vmatprep.subr.mxu0 0.0
    %125 = vmatpush1.msra.mxu0 0.0
    %126 = vmatprep.subr.mxu0 0.0
    %127 = vmatpush1.msra.mxu0 0.0
    %128 = vmatprep.subr.mxu0 0.0
    %129 = vmatpush1.msra.mxu0 0.0
    %130 = vmatprep.subr.mxu0 0.0
    %131 = vmatpush1.msra.mxu0 0.0
    %132 = vmatprep.subr.mxu0 0.0
    %133 = vmatpush1.msra.mxu0 0.0
    %134 = vmatprep.subr.mxu0 0.0
    %135 = vmatpush1.msra.mxu0 0.0
    %136 = vmatprep.subr.mxu0 0.0
    %137 = vmatpush1.msra.mxu0 0.0
    %138 = vmatprep.subr.mxu0 0.0
    %139 = vmatpush1.msra.mxu0 0.0
    %140 = vmatprep.subr.mxu0 0.0
    %141 = vmatpush1.msra.mxu0 0.0
    %142 = vmatprep.subr.mxu0 0.0
    %143 = vmatpush1.msra.mxu0 0.0
    %144 = vmatprep.subr.mxu0 0.0
    %145 = vmatpush1.msra.mxu0 0.0
    %146 = vmatprep.subr.mxu0 0.0
    %147 = vmatpush1.msra.mxu0 0.0
    %148 = vmatprep.subr.mxu0 0.0
    %149 = vmatpush1.msra.mxu0 0.0
    %150 = vmatprep.subr.mxu0 0.0
    %151 = vmatpush1.msra.mxu0 0.0
    %152 = vmatprep.subr.mxu0 0.0
    %153 = vmatpush1.msra.mxu0 0.0
    %154 = vmatprep.mubr.f32.mxu0 0.0
    %155 = vmatmul.mubr.f32.gmra.mrb[0].mxu0 %v66
    %v156 = vpop.f32.mrb[0].mxu0
    %v157 = vadd.f32 %v88, %v156
    %v158 = vpop.f32.mrb[0].mxu0
    %159 = vdwg.mxu0
    %v160 = vmax.f32 %v157, 0.0
    %v161 = vld [vmem:[#allocation7] sm:$0xff]
    %v162 = vld [vmem:[#allocation7 + $0x8] sm:$0xff]
    %v163 = vld [vmem:[#allocation7 + $0x10] sm:$0xff]
    %v164 = vld [vmem:[#allocation7 + $0x18] sm:$0xff]
    %v165 = vld [vmem:[#allocation7 + $0x20] sm:$0xff]
    %v166 = vld [vmem:[#allocation7 + $0x28] sm:$0xff]
    %v167 = vld [vmem:[#allocation7 + $0x30] sm:$0xff]
    %v168 = vld [vmem:[#allocation7 + $0x38] sm:$0xff]
    %v169 = vld [vmem:[#allocation7 + $0x40] sm:$0xff]
    %v170 = vld [vmem:[#allocation7 + $0x48] sm:$0xff]
    %v171 = vld [vmem:[#allocation7 + $0x50] sm:$0xff]
    %v172 = vld [vmem:[#allocation7 + $0x58] sm:$0xff]
    %v173 = vld [vmem:[#allocation7 + $0x60] sm:$0xff]
    %v174 = vld [vmem:[#allocation7 + $0x68] sm:$0xff]
    %v175 = vld [vmem:[#allocation7 + $0x70] sm:$0xff]
    %v176 = vld [vmem:[#allocation7 + $0x78] sm:$0xff]
    %v177 = vld [vmem:[%s4] sm:$0x1]
    %v179 = vlaneseq
    %v180 = vshrl.u32 %v179, 7
    %v181 = vsub.s32 0, %v180
    %v182 = vrot.slane %v177, %v181
    %184 = vmatprep.subr.mxu0 0.0
    %185 = vmatpush1.msra.mxu0 %v161
    %186 = vmatprep.subr.mxu0 0.0
    %187 = vmatpush1.msra.mxu0 %v162
    %188 = vmatprep.subr.mxu0 0.0
    %189 = vmatpush1.msra.mxu0 %v163
    %190 = vmatprep.subr.mxu0 0.0
    %191 = vmatpush1.msra.mxu0 %v164
    %192 = vmatprep.subr.mxu0 0.0
    %193 = vmatpush1.msra.mxu0 %v165
    %194 = vmatprep.subr.mxu0 0.0
    %195 = vmatpush1.msra.mxu0 %v166
    %196 = vmatprep.subr.mxu0 0.0
    %197 = vmatpush1.msra.mxu0 %v167
    %198 = vmatprep.subr.mxu0 0.0
    %199 = vmatpush1.msra.mxu0 %v168
    %200 = vmatprep.subr.mxu0 0.0
    %201 = vmatpush1.msra.mxu0 %v169
    %202 = vmatprep.subr.mxu0 0.0
    %203 = vmatpush1.msra.mxu0 %v170
    %204 = vmatprep.subr.mxu0 0.0
    %205 = vmatpush1.msra.mxu0 %v171
    %206 = vmatprep.subr.mxu0 0.0
    %207 = vmatpush1.msra.mxu0 %v172
    %208 = vmatprep.subr.mxu0 0.0
    %209 = vmatpush1.msra.mxu0 %v173
    %210 = vmatprep.subr.mxu0 0.0
    %211 = vmatpush1.msra.mxu0 %v174
    %212 = vmatprep.subr.mxu0 0.0
    %213 = vmatpush1.msra.mxu0 %v175
    %214 = vmatprep.subr.mxu0 0.0
    %215 = vmatpush1.msra.mxu0 %v176
    %216 = vmatprep.subr.mxu0 0.0
    %217 = vmatpush1.msra.mxu0 0.0
    %218 = vmatprep.subr.mxu0 0.0
    %219 = vmatpush1.msra.mxu0 0.0
    %220 = vmatprep.subr.mxu0 0.0
    %221 = vmatpush1.msra.mxu0 0.0
    %222 = vmatprep.subr.mxu0 0.0
    %223 = vmatpush1.msra.mxu0 0.0
    %224 = vmatprep.subr.mxu0 0.0
    %225 = vmatpush1.msra.mxu0 0.0
    %226 = vmatprep.subr.mxu0 0.0
    %227 = vmatpush1.msra.mxu0 0.0
    %228 = vmatprep.subr.mxu0 0.0
    %229 = vmatpush1.msra.mxu0 0.0
    %230 = vmatprep.subr.mxu0 0.0
    %231 = vmatpush1.msra.mxu0 0.0
    %232 = vmatprep.subr.mxu0 0.0
    %233 = vmatpush1.msra.mxu0 0.0
    %234 = vmatprep.subr.mxu0 0.0
    %235 = vmatpush1.msra.mxu0 0.0
    %236 = vmatprep.subr.mxu0 0.0
    %237 = vmatpush1.msra.mxu0 0.0
    %238 = vmatprep.subr.mxu0 0.0
    %239 = vmatpush1.msra.mxu0 0.0
    %240 = vmatprep.subr.mxu0 0.0
    %241 = vmatpush1.msra.mxu0 0.0
    %242 = vmatprep.subr.mxu0 0.0
    %243 = vmatpush1.msra.mxu0 0.0
    %244 = vmatprep.subr.mxu0 0.0
    %245 = vmatpush1.msra.mxu0 0.0
    %246 = vmatprep.subr.mxu0 0.0
    %247 = vmatpush1.msra.mxu0 0.0
    %248 = vmatprep.mubr.f32.mxu0 0.0
    %249 = vmatmul.mubr.f32.gmra.mrb[0].mxu0 %v160
    %v250 = vpop.f32.mrb[0].mxu0
    %v251 = vadd.f32 %v182, %v250
    %v252 = vpop.f32.mrb[0].mxu0
    %253 = vdwg.mxu0
    %v254 = vmax.f32 %v251, 0.0
    %v255 = vld [vmem:[%s5] sm:$0x1]
    %v257 = vlaneseq
    %v258 = vshrl.u32 %v257, 7
    %v259 = vsub.s32 0, %v258
    %v260 = vrot.slane %v255, %v259
    %v262 = vmul.f32 %v254, %v260
    %263 = vadd.xlane.f32.xlu0 %v262
    %v264 = vpop.xlane.xlu0 %263
    %s265 = sld [smem:[#allocation2]]
    %v266 = vstv %s265
    %v267 = vadd.f32 %v264, %v266
    %v268 = vxor.u32 %v267, 2147483648
    %v269 = vmul.f32 %v268, 1.442695
    %v270 = vpow.pop %v269
    %v271 = vadd.f32 %v270, 1.0
    %v272 = vrcp.pop %v271
    %v273 = vmul.f32 1.0, %v272
    %vm274 = vcmask 7168
    %275 = vst.msk [vmem:[%s7] sm:$0xff] %vm274, %v273
    // Predicated region
    $region42: #{tpu_custom_call.1} parent=1 // pred_check
      _
    $region43: #{tpu_custom_call.1} parent=1 // pred_check_branch
      %277 = sbr.rel (0) target = $region45
    $region44: #{tpu_custom_call.1} parent=1 // pred_region
      _
    $region45: #{tpu_custom_call.1} parent=1 // pred_fallthru
      _
    // Predicated region
    $region46: #{tpu_custom_call.1} parent=1 // pred_check
      _
    $region47: #{tpu_custom_call.1} parent=1 // pred_check_branch
      %279 = sbr.rel (0) target = $region49
    $region48: #{tpu_custom_call.1} parent=1 // pred_region
      _
    $region49: #{tpu_custom_call.1} parent=1 // pred_fallthru
      _
    %280 = vsyncpa [#allocation4], 1
    %281 = vsyncpa [#allocation6], 1

</llo_original>
